<compile_context>
chip_gen: v5e
topology: v5e:2x2
jax: 0.10.0
libtpu: 0.0.40
codegen_flags: <defaults>
</compile_context>

<pallas_src>
import functools

import jax
import jax.numpy as jnp
from jax import lax
from jax.experimental import pallas as pl
from jax.experimental.pallas import tpu as pltpu

TAU = 2.0
V_THRESHOLD = 1.0
V_RESET = 0.0
BN_EPS = 1e-5


def _round_up(x, m):
    return (x + m - 1) // m * m


def _cdiv(a, b):
    return -(-a // b)


def _conv_bn_lif_kernel(x_ref, w_ref, shift_ref, out_ref, *,
                        T, K, L, row_chunk, lane_chunk):
    """Fused 1xK conv (BN and 1/tau folded into taps) + multi-step LIF neuron.

    x_ref:     (block_r, L + K - 1) f32 VMEM   rows on sublanes, zero-padded seq on lanes
    w_ref:     (T, K)               f32 SMEM   taps:  conv_w * gamma / sqrt(var+eps) / tau
    shift_ref: (T,)                 f32 SMEM   bias:  ((conv_b - mean)*scale + beta) / tau
    out_ref:   (T, block_r, L)      VMEM       output spikes (0/1), lane axis = L
    """
    block_r = out_ref.shape[1]
    decay = jnp.float32(1.0 - 1.0 / TAU)

    # Hoist all SMEM scalar parameter reads out of every loop (live in sregs).
    w = [[w_ref[t, k] for k in range(K)] for t in range(T)]
    b = [shift_ref[t] for t in range(T)]

    n_lane_full = L // lane_chunk
    lane_tail = L - n_lane_full * lane_chunk
    n_row = block_r // row_chunk

    def do_chunk(r0, l0, cl):
        # One (row_chunk, cl + K - 1) load (halo included, lane-aligned start),
        # then K static lane shifts, all reused across the T LIF timesteps.
        xw = x_ref[pl.ds(r0, row_chunk), pl.ds(l0, cl + K - 1)]
        xs = [xw[:, k:k + cl] for k in range(K)]
        v = jnp.zeros((row_chunk, cl), jnp.float32)
        for t in range(T):                       # LIF recurrence over conv out-channels
            z = xs[0] * w[t][0]
            for k in range(1, K):
                z = z + xs[k] * w[t][k]
            z = z + b[t]                         # conv bias + BN + 1/tau folded in
            v = v * decay + z                    # charge: v += (bn_out - v)/tau
            spike = v >= V_THRESHOLD
            out_ref[t, pl.ds(r0, row_chunk), pl.ds(l0, cl)] = spike.astype(out_ref.dtype)
            v = jnp.where(spike, V_RESET, v)     # hard reset

    def do_rows(r0):
        if n_lane_full == 1:
            do_chunk(r0, 0, lane_chunk)
        elif n_lane_full > 1:
            def lane_body(li, carry):
                l0 = pl.multiple_of(li * lane_chunk, lane_chunk)
                do_chunk(r0, l0, lane_chunk)
                return carry
            lax.fori_loop(0, n_lane_full, lane_body, 0)
        if lane_tail > 0:
            do_chunk(r0, n_lane_full * lane_chunk, lane_tail)

    if n_row == 1:
        do_rows(0)
    else:
        def row_body(ri, carry):
            do_rows(pl.multiple_of(ri * row_chunk, row_chunk))
            return carry
        lax.fori_loop(0, n_row, row_body, 0)


def conv_encoder_forward(x, conv_w, conv_b, bn_gamma, bn_beta, bn_mean, bn_var,
                         *, out_dtype=jnp.bfloat16):
    """x: (B, L, C). conv_w: (T, K) (the (T,1,1,K) Conv2d weight squeezed).

    Returns spikes of shape (T, B, C, L). Spikes are exactly 0/1, so the
    bfloat16 default output dtype is lossless and halves HBM writeback.
    """
    B, L, C = x.shape
    T, K = conv_w.shape
    assert K % 2 == 1, "padding = K//2 reproduces 'same' conv only for odd K"
    pad = K // 2
    R = B * C
    out_isize = jnp.dtype(out_dtype).itemsize

    # ---- row (sublane) tiling --------------------------------------------
    # Per-row bytes of one (input + output) buffer; keep the double-buffered
    # pipelined working set under ~20 MiB (safe on v5e/v6e/v7x scoped VMEM).
    bytes_per_row = (L + 2 * pad) * 4 + T * L * out_isize
    budget = 20 * 1024 * 1024
    if R < 8:
        block_r = R                                  # full (tiny) row dim
    else:
        cap = max(8, min((budget // (2 * bytes_per_row)) // 8 * 8, 512, (R // 8) * 8))
        block_r = cap
        # Give the pipeline / v7x megacore >= 4 grid steps when rows allow it.
        min_steps = 4
        if _cdiv(R, block_r) < min_steps and R >= min_steps * 8:
            block_r = min(block_r, _round_up(_cdiv(R, min_steps), 8))
    num_r_blocks = _cdiv(R, block_r)
    r_in = num_r_blocks * block_r                    # input rows padded to grid coverage

    # In-kernel chunking: ~4 vregs per live array -> no spills at any tile size.
    if block_r < 8:
        row_chunk = block_r
    elif block_r % 32 == 0:
        row_chunk = 32
    elif block_r % 16 == 0:
        row_chunk = 16
    else:
        row_chunk = 8
    lane_chunk = 128

    # ---- fold BatchNorm (running stats), conv bias and 1/tau into the taps --
    inv_tau = jnp.float32(1.0 / TAU)
    scale = (bn_gamma / jnp.sqrt(bn_var + BN_EPS)).astype(jnp.float32)
    w_fused = (conv_w.astype(jnp.float32) * scale[:, None]) * inv_tau
    shift = (((conv_b - bn_mean) * scale + bn_beta) * inv_tau).astype(jnp.float32)

    # ---- glue: (B, L, C) -> (R=B*C, L+2*pad); rows on sublanes, seq on lanes.
    xr = jnp.transpose(x, (0, 2, 1)).reshape(R, L).astype(jnp.float32)
    xp = jnp.pad(xr, ((0, r_in - R), (pad, pad)))

    working_set = 2 * block_r * bytes_per_row
    # Explicit scoped-VMEM limit sized from the actual pipelined working set
    # (>=16 MiB floor for compiler scratch; normal configs land <= ~26 MiB).
    vmem_limit = int(min(max(working_set + (6 << 20), 16 << 20), 100 << 20))

    kernel = functools.partial(_conv_bn_lif_kernel, T=T, K=K, L=L,
                               row_chunk=row_chunk, lane_chunk=lane_chunk)
    spikes = pl.pallas_call(
        kernel,
        out_shape=jax.ShapeDtypeStruct((T, R, L), out_dtype),
        grid=(num_r_blocks,),
        in_specs=[
            pl.BlockSpec((block_r, L + 2 * pad), lambda r: (r, 0)),   # input tile (VMEM)
            pl.BlockSpec(memory_space=pltpu.MemorySpace.SMEM),        # fused taps (T, K)
            pl.BlockSpec(memory_space=pltpu.MemorySpace.SMEM),        # fused shift (T,)
        ],
        out_specs=pl.BlockSpec((T, block_r, L), lambda r: (0, r, 0)),
        compiler_params=pltpu.CompilerParams(
            dimension_semantics=("parallel",),
            vmem_limit_bytes=vmem_limit,
        ),
    )(xp, w_fused, shift)

    # (T, R=B*C, L) -> (T, B, C, L): pure reshape, no transpose / copy pass.
    return spikes.reshape(T, B, C, L)


def reference_forward(x, conv_w, conv_b, bn_gamma, bn_beta, bn_mean, bn_var):
    """Pure-JAX reference mirroring the PyTorch forward (unfused BN math order)."""
    B, L, C = x.shape
    T, K = conv_w.shape
    pad = K // 2
    xp = jnp.transpose(x, (0, 2, 1)).astype(jnp.float32)              # (B, C, L)
    xpad = jnp.pad(xp, ((0, 0), (0, 0), (pad, pad)))                  # (B, C, L+K-1)
    scale = bn_gamma / jnp.sqrt(bn_var + BN_EPS)
    shift = (conv_b - bn_mean) * scale + bn_beta
    spks = []
    v = jnp.zeros((B, C, L), jnp.float32)
    for t in range(T):
        acc = jnp.zeros((B, C, L), jnp.float32)
        for k in range(K):
            acc = acc + conv_w[t, k] * xpad[:, :, k:k + L]
        z = acc * scale[t] + shift[t]
        v = v + (z - v) * (1.0 / TAU)
        s = (v >= V_THRESHOLD).astype(jnp.float32)
        v = v * (1.0 - s) + s * V_RESET
        spks.append(s)
    return jnp.stack(spks, axis=0)                                     # (T, B, C, L)


if __name__ == "__main__":
    # Small shapes consistent with the module: batch=2, seq_len=16, features=4,
    # output_size (== LIF time steps) = 8, kernel_size = 3.
    B, L, C = 2, 16, 4
    T, K = 8, 3

    key = jax.random.PRNGKey(0)
    kx, kw, kb, kg, kbe, km, kv = jax.random.split(key, 7)

    x = jax.random.normal(kx, (B, L, C), dtype=jnp.float32)

    # Deterministic synthetic parameters (shapes from the module's __init__).
    conv_w = 0.5 * jax.random.normal(kw, (T, K), dtype=jnp.float32)    # Conv2d weight (T,1,1,K)
    conv_b = 0.1 * jax.random.normal(kb, (T,), dtype=jnp.float32)      # Conv2d bias
    bn_gamma = 1.0 + 0.1 * jax.random.normal(kg, (T,), dtype=jnp.float32)
    bn_beta = 0.05 * jax.random.normal(kbe, (T,), dtype=jnp.float32)
    bn_mean = 0.02 * jax.random.normal(km, (T,), dtype=jnp.float32)    # running_mean (eval-mode BN)
    bn_var = 1.0 + 0.1 * jax.nn.softplus(jax.random.normal(kv, (T,))).astype(jnp.float32)

    out = conv_encoder_forward(x, conv_w, conv_b, bn_gamma, bn_beta, bn_mean, bn_var)
    out = jax.block_until_ready(out)

    ref = reference_forward(x, conv_w, conv_b, bn_gamma, bn_beta, bn_mean, bn_var)
    assert out.shape == (T, B, C, L), out.shape
    assert bool(jnp.all((out == 0) | (out == 1)))
    # BN scale and 1/tau are folded into the conv taps in the kernel, so float
    # rounding order differs slightly from the reference; spikes can only differ
    # if v lands (near-)exactly on the threshold, so require a near-zero mismatch
    # fraction instead of bitwise equality.
    mismatch = float(jnp.mean(jnp.abs(out.astype(jnp.float32) - ref)))
    assert mismatch < 5e-3, f"spike mismatch fraction {mismatch} vs reference"

    print("KERNEL_OK")
</pallas_src>

<mosaic_0001>
module attributes {stable_mosaic.version = 11 : i64} {
  func.func @_conv_bn_lif_kernel(%arg0: i32, %arg1: memref<8x18xf32, #tpu.memory_space<vmem>>, %arg2: memref<8x3xf32, #tpu.memory_space<smem>>, %arg3: memref<8xf32, #tpu.memory_space<smem>>, %arg4: memref<8x8x16xbf16, #tpu.memory_space<vmem>>) attributes {dimension_semantics = [#tpu.dimension_semantics<parallel>], iteration_bounds = array<i64: 1>, scalar_prefetch = 0 : i64, scratch_operands = 0 : i64, tpu.core_type = #tpu.core_type<tc>, window_params = [{transform_indices = @transform_0, window_bounds = array<i64: 8, 18>}, {transform_indices = @transform_1, window_bounds = array<i64: 8, 3>}, {transform_indices = @transform_2, window_bounds = array<i64: 8>}, {transform_indices = @transform_3, window_bounds = array<i64: 8, 8, 16>}]} {
    %c0 = arith.constant 0 : index
    %c0_0 = arith.constant 0 : index
    %0 = memref.load %arg2[%c0, %c0_0] : memref<8x3xf32, #tpu.memory_space<smem>>
    %c0_1 = arith.constant 0 : index
    %c1 = arith.constant 1 : index
    %1 = memref.load %arg2[%c0_1, %c1] : memref<8x3xf32, #tpu.memory_space<smem>>
    %c0_2 = arith.constant 0 : index
    %c2 = arith.constant 2 : index
    %2 = memref.load %arg2[%c0_2, %c2] : memref<8x3xf32, #tpu.memory_space<smem>>
    %c1_3 = arith.constant 1 : index
    %c0_4 = arith.constant 0 : index
    %3 = memref.load %arg2[%c1_3, %c0_4] : memref<8x3xf32, #tpu.memory_space<smem>>
    %c1_5 = arith.constant 1 : index
    %c1_6 = arith.constant 1 : index
    %4 = memref.load %arg2[%c1_5, %c1_6] : memref<8x3xf32, #tpu.memory_space<smem>>
    %c1_7 = arith.constant 1 : index
    %c2_8 = arith.constant 2 : index
    %5 = memref.load %arg2[%c1_7, %c2_8] : memref<8x3xf32, #tpu.memory_space<smem>>
    %c2_9 = arith.constant 2 : index
    %c0_10 = arith.constant 0 : index
    %6 = memref.load %arg2[%c2_9, %c0_10] : memref<8x3xf32, #tpu.memory_space<smem>>
    %c2_11 = arith.constant 2 : index
    %c1_12 = arith.constant 1 : index
    %7 = memref.load %arg2[%c2_11, %c1_12] : memref<8x3xf32, #tpu.memory_space<smem>>
    %c2_13 = arith.constant 2 : index
    %c2_14 = arith.constant 2 : index
    %8 = memref.load %arg2[%c2_13, %c2_14] : memref<8x3xf32, #tpu.memory_space<smem>>
    %c3 = arith.constant 3 : index
    %c0_15 = arith.constant 0 : index
    %9 = memref.load %arg2[%c3, %c0_15] : memref<8x3xf32, #tpu.memory_space<smem>>
    %c3_16 = arith.constant 3 : index
    %c1_17 = arith.constant 1 : index
    %10 = memref.load %arg2[%c3_16, %c1_17] : memref<8x3xf32, #tpu.memory_space<smem>>
    %c3_18 = arith.constant 3 : index
    %c2_19 = arith.constant 2 : index
    %11 = memref.load %arg2[%c3_18, %c2_19] : memref<8x3xf32, #tpu.memory_space<smem>>
    %c4 = arith.constant 4 : index
    %c0_20 = arith.constant 0 : index
    %12 = memref.load %arg2[%c4, %c0_20] : memref<8x3xf32, #tpu.memory_space<smem>>
    %c4_21 = arith.constant 4 : index
    %c1_22 = arith.constant 1 : index
    %13 = memref.load %arg2[%c4_21, %c1_22] : memref<8x3xf32, #tpu.memory_space<smem>>
    %c4_23 = arith.constant 4 : index
    %c2_24 = arith.constant 2 : index
    %14 = memref.load %arg2[%c4_23, %c2_24] : memref<8x3xf32, #tpu.memory_space<smem>>
    %c5 = arith.constant 5 : index
    %c0_25 = arith.constant 0 : index
    %15 = memref.load %arg2[%c5, %c0_25] : memref<8x3xf32, #tpu.memory_space<smem>>
    %c5_26 = arith.constant 5 : index
    %c1_27 = arith.constant 1 : index
    %16 = memref.load %arg2[%c5_26, %c1_27] : memref<8x3xf32, #tpu.memory_space<smem>>
    %c5_28 = arith.constant 5 : index
    %c2_29 = arith.constant 2 : index
    %17 = memref.load %arg2[%c5_28, %c2_29] : memref<8x3xf32, #tpu.memory_space<smem>>
    %c6 = arith.constant 6 : index
    %c0_30 = arith.constant 0 : index
    %18 = memref.load %arg2[%c6, %c0_30] : memref<8x3xf32, #tpu.memory_space<smem>>
    %c6_31 = arith.constant 6 : index
    %c1_32 = arith.constant 1 : index
    %19 = memref.load %arg2[%c6_31, %c1_32] : memref<8x3xf32, #tpu.memory_space<smem>>
    %c6_33 = arith.constant 6 : index
    %c2_34 = arith.constant 2 : index
    %20 = memref.load %arg2[%c6_33, %c2_34] : memref<8x3xf32, #tpu.memory_space<smem>>
    %c7 = arith.constant 7 : index
    %c0_35 = arith.constant 0 : index
    %21 = memref.load %arg2[%c7, %c0_35] : memref<8x3xf32, #tpu.memory_space<smem>>
    %c7_36 = arith.constant 7 : index
    %c1_37 = arith.constant 1 : index
    %22 = memref.load %arg2[%c7_36, %c1_37] : memref<8x3xf32, #tpu.memory_space<smem>>
    %c7_38 = arith.constant 7 : index
    %c2_39 = arith.constant 2 : index
    %23 = memref.load %arg2[%c7_38, %c2_39] : memref<8x3xf32, #tpu.memory_space<smem>>
    %c0_40 = arith.constant 0 : index
    %24 = memref.load %arg3[%c0_40] : memref<8xf32, #tpu.memory_space<smem>>
    %c1_41 = arith.constant 1 : index
    %25 = memref.load %arg3[%c1_41] : memref<8xf32, #tpu.memory_space<smem>>
    %c2_42 = arith.constant 2 : index
    %26 = memref.load %arg3[%c2_42] : memref<8xf32, #tpu.memory_space<smem>>
    %c3_43 = arith.constant 3 : index
    %27 = memref.load %arg3[%c3_43] : memref<8xf32, #tpu.memory_space<smem>>
    %c4_44 = arith.constant 4 : index
    %28 = memref.load %arg3[%c4_44] : memref<8xf32, #tpu.memory_space<smem>>
    %c5_45 = arith.constant 5 : index
    %29 = memref.load %arg3[%c5_45] : memref<8xf32, #tpu.memory_space<smem>>
    %c6_46 = arith.constant 6 : index
    %30 = memref.load %arg3[%c6_46] : memref<8xf32, #tpu.memory_space<smem>>
    %c7_47 = arith.constant 7 : index
    %31 = memref.load %arg3[%c7_47] : memref<8xf32, #tpu.memory_space<smem>>
    %c0_48 = arith.constant 0 : index
    %c0_49 = arith.constant 0 : index
    %32 = vector.load %arg1[%c0_48, %c0_49] : memref<8x18xf32, #tpu.memory_space<vmem>>, vector<8x18xf32>
    %33 = vector.extract_strided_slice %32 {offsets = [0, 0], sizes = [8, 16], strides = [1, 1]} : vector<8x18xf32> to vector<8x16xf32>
    %34 = vector.extract_strided_slice %32 {offsets = [0, 1], sizes = [8, 16], strides = [1, 1]} : vector<8x18xf32> to vector<8x16xf32>
    %35 = vector.extract_strided_slice %32 {offsets = [0, 2], sizes = [8, 16], strides = [1, 1]} : vector<8x18xf32> to vector<8x16xf32>
    %cst = arith.constant 0.000000e+00 : f32
    %36 = vector.broadcast %cst : f32 to vector<8x16xf32>
    %37 = vector.broadcast %0 : f32 to vector<8x16xf32>
    %38 = arith.mulf %33, %37 : vector<8x16xf32>
    %39 = vector.broadcast %1 : f32 to vector<8x16xf32>
    %40 = arith.mulf %34, %39 : vector<8x16xf32>
    %41 = arith.addf %38, %40 : vector<8x16xf32>
    %42 = vector.broadcast %2 : f32 to vector<8x16xf32>
    %43 = arith.mulf %35, %42 : vector<8x16xf32>
    %44 = arith.addf %41, %43 : vector<8x16xf32>
    %45 = vector.broadcast %24 : f32 to vector<8x16xf32>
    %46 = arith.addf %44, %45 : vector<8x16xf32>
    %cst_50 = arith.constant 5.000000e-01 : f32
    %47 = vector.broadcast %cst_50 : f32 to vector<8x16xf32>
    %48 = arith.mulf %36, %47 : vector<8x16xf32>
    %49 = arith.addf %48, %46 : vector<8x16xf32>
    %cst_51 = arith.constant 1.000000e+00 : f32
    %50 = vector.broadcast %cst_51 : f32 to vector<8x16xf32>
    %51 = arith.cmpf oge, %49, %50 : vector<8x16xf32>
    %52 = arith.extui %51 : vector<8x16xi1> to vector<8x16xi32>
    %53 = arith.sitofp %52 : vector<8x16xi32> to vector<8x16xf32>
    %54 = arith.truncf %53 : vector<8x16xf32> to vector<8x16xbf16>
    %c0_52 = arith.constant 0 : index
    %c0_53 = arith.constant 0 : index
    %c0_54 = arith.constant 0 : index
    %55 = vector.load %arg4[%c0_52, %c0_53, %c0_54] : memref<8x8x16xbf16, #tpu.memory_space<vmem>>, vector<1x8x16xbf16>
    %56 = vector.shape_cast %55 : vector<1x8x16xbf16> to vector<8x16xbf16>
    %57 = vector.shape_cast %54 : vector<8x16xbf16> to vector<1x8x16xbf16>
    tpu.vector_store %arg4[%c0_52, %c0_53, %c0_54], %57 {strides = array<i32>} : memref<8x8x16xbf16, #tpu.memory_space<vmem>>, vector<1x8x16xbf16>,
    %cst_55 = arith.constant 0.000000e+00 : f32
    %58 = vector.broadcast %cst_55 : f32 to vector<8x16xf32>
    %59 = arith.select %51, %58, %49 : vector<8x16xi1>, vector<8x16xf32>
    %60 = vector.broadcast %3 : f32 to vector<8x16xf32>
    %61 = arith.mulf %33, %60 : vector<8x16xf32>
    %62 = vector.broadcast %4 : f32 to vector<8x16xf32>
    %63 = arith.mulf %34, %62 : vector<8x16xf32>
    %64 = arith.addf %61, %63 : vector<8x16xf32>
    %65 = vector.broadcast %5 : f32 to vector<8x16xf32>
    %66 = arith.mulf %35, %65 : vector<8x16xf32>
    %67 = arith.addf %64, %66 : vector<8x16xf32>
    %68 = vector.broadcast %25 : f32 to vector<8x16xf32>
    %69 = arith.addf %67, %68 : vector<8x16xf32>
    %cst_56 = arith.constant 5.000000e-01 : f32
    %70 = vector.broadcast %cst_56 : f32 to vector<8x16xf32>
    %71 = arith.mulf %59, %70 : vector<8x16xf32>
    %72 = arith.addf %71, %69 : vector<8x16xf32>
    %cst_57 = arith.constant 1.000000e+00 : f32
    %73 = vector.broadcast %cst_57 : f32 to vector<8x16xf32>
    %74 = arith.cmpf oge, %72, %73 : vector<8x16xf32>
    %75 = arith.extui %74 : vector<8x16xi1> to vector<8x16xi32>
    %76 = arith.sitofp %75 : vector<8x16xi32> to vector<8x16xf32>
    %77 = arith.truncf %76 : vector<8x16xf32> to vector<8x16xbf16>
    %c1_58 = arith.constant 1 : index
    %c0_59 = arith.constant 0 : index
    %c0_60 = arith.constant 0 : index
    %78 = vector.load %arg4[%c1_58, %c0_59, %c0_60] : memref<8x8x16xbf16, #tpu.memory_space<vmem>>, vector<1x8x16xbf16>
    %79 = vector.shape_cast %78 : vector<1x8x16xbf16> to vector<8x16xbf16>
    %80 = vector.shape_cast %77 : vector<8x16xbf16> to vector<1x8x16xbf16>
    tpu.vector_store %arg4[%c1_58, %c0_59, %c0_60], %80 {strides = array<i32>} : memref<8x8x16xbf16, #tpu.memory_space<vmem>>, vector<1x8x16xbf16>,
    %cst_61 = arith.constant 0.000000e+00 : f32
    %81 = vector.broadcast %cst_61 : f32 to vector<8x16xf32>
    %82 = arith.select %74, %81, %72 : vector<8x16xi1>, vector<8x16xf32>
    %83 = vector.broadcast %6 : f32 to vector<8x16xf32>
    %84 = arith.mulf %33, %83 : vector<8x16xf32>
    %85 = vector.broadcast %7 : f32 to vector<8x16xf32>
    %86 = arith.mulf %34, %85 : vector<8x16xf32>
    %87 = arith.addf %84, %86 : vector<8x16xf32>
    %88 = vector.broadcast %8 : f32 to vector<8x16xf32>
    %89 = arith.mulf %35, %88 : vector<8x16xf32>
    %90 = arith.addf %87, %89 : vector<8x16xf32>
    %91 = vector.broadcast %26 : f32 to vector<8x16xf32>
    %92 = arith.addf %90, %91 : vector<8x16xf32>
    %cst_62 = arith.constant 5.000000e-01 : f32
    %93 = vector.broadcast %cst_62 : f32 to vector<8x16xf32>
    %94 = arith.mulf %82, %93 : vector<8x16xf32>
    %95 = arith.addf %94, %92 : vector<8x16xf32>
    %cst_63 = arith.constant 1.000000e+00 : f32
    %96 = vector.broadcast %cst_63 : f32 to vector<8x16xf32>
    %97 = arith.cmpf oge, %95, %96 : vector<8x16xf32>
    %98 = arith.extui %97 : vector<8x16xi1> to vector<8x16xi32>
    %99 = arith.sitofp %98 : vector<8x16xi32> to vector<8x16xf32>
    %100 = arith.truncf %99 : vector<8x16xf32> to vector<8x16xbf16>
    %c2_64 = arith.constant 2 : index
    %c0_65 = arith.constant 0 : index
    %c0_66 = arith.constant 0 : index
    %101 = vector.load %arg4[%c2_64, %c0_65, %c0_66] : memref<8x8x16xbf16, #tpu.memory_space<vmem>>, vector<1x8x16xbf16>
    %102 = vector.shape_cast %101 : vector<1x8x16xbf16> to vector<8x16xbf16>
    %103 = vector.shape_cast %100 : vector<8x16xbf16> to vector<1x8x16xbf16>
    tpu.vector_store %arg4[%c2_64, %c0_65, %c0_66], %103 {strides = array<i32>} : memref<8x8x16xbf16, #tpu.memory_space<vmem>>, vector<1x8x16xbf16>,
    %cst_67 = arith.constant 0.000000e+00 : f32
    %104 = vector.broadcast %cst_67 : f32 to vector<8x16xf32>
    %105 = arith.select %97, %104, %95 : vector<8x16xi1>, vector<8x16xf32>
    %106 = vector.broadcast %9 : f32 to vector<8x16xf32>
    %107 = arith.mulf %33, %106 : vector<8x16xf32>
    %108 = vector.broadcast %10 : f32 to vector<8x16xf32>
    %109 = arith.mulf %34, %108 : vector<8x16xf32>
    %110 = arith.addf %107, %109 : vector<8x16xf32>
    %111 = vector.broadcast %11 : f32 to vector<8x16xf32>
    %112 = arith.mulf %35, %111 : vector<8x16xf32>
    %113 = arith.addf %110, %112 : vector<8x16xf32>
    %114 = vector.broadcast %27 : f32 to vector<8x16xf32>
    %115 = arith.addf %113, %114 : vector<8x16xf32>
    %cst_68 = arith.constant 5.000000e-01 : f32
    %116 = vector.broadcast %cst_68 : f32 to vector<8x16xf32>
    %117 = arith.mulf %105, %116 : vector<8x16xf32>
    %118 = arith.addf %117, %115 : vector<8x16xf32>
    %cst_69 = arith.constant 1.000000e+00 : f32
    %119 = vector.broadcast %cst_69 : f32 to vector<8x16xf32>
    %120 = arith.cmpf oge, %118, %119 : vector<8x16xf32>
    %121 = arith.extui %120 : vector<8x16xi1> to vector<8x16xi32>
    %122 = arith.sitofp %121 : vector<8x16xi32> to vector<8x16xf32>
    %123 = arith.truncf %122 : vector<8x16xf32> to vector<8x16xbf16>
    %c3_70 = arith.constant 3 : index
    %c0_71 = arith.constant 0 : index
    %c0_72 = arith.constant 0 : index
    %124 = vector.load %arg4[%c3_70, %c0_71, %c0_72] : memref<8x8x16xbf16, #tpu.memory_space<vmem>>, vector<1x8x16xbf16>
    %125 = vector.shape_cast %124 : vector<1x8x16xbf16> to vector<8x16xbf16>
    %126 = vector.shape_cast %123 : vector<8x16xbf16> to vector<1x8x16xbf16>
    tpu.vector_store %arg4[%c3_70, %c0_71, %c0_72], %126 {strides = array<i32>} : memref<8x8x16xbf16, #tpu.memory_space<vmem>>, vector<1x8x16xbf16>,
    %cst_73 = arith.constant 0.000000e+00 : f32
    %127 = vector.broadcast %cst_73 : f32 to vector<8x16xf32>
    %128 = arith.select %120, %127, %118 : vector<8x16xi1>, vector<8x16xf32>
    %129 = vector.broadcast %12 : f32 to vector<8x16xf32>
    %130 = arith.mulf %33, %129 : vector<8x16xf32>
    %131 = vector.broadcast %13 : f32 to vector<8x16xf32>
    %132 = arith.mulf %34, %131 : vector<8x16xf32>
    %133 = arith.addf %130, %132 : vector<8x16xf32>
    %134 = vector.broadcast %14 : f32 to vector<8x16xf32>
    %135 = arith.mulf %35, %134 : vector<8x16xf32>
    %136 = arith.addf %133, %135 : vector<8x16xf32>
    %137 = vector.broadcast %28 : f32 to vector<8x16xf32>
    %138 = arith.addf %136, %137 : vector<8x16xf32>
    %cst_74 = arith.constant 5.000000e-01 : f32
    %139 = vector.broadcast %cst_74 : f32 to vector<8x16xf32>
    %140 = arith.mulf %128, %139 : vector<8x16xf32>
    %141 = arith.addf %140, %138 : vector<8x16xf32>
    %cst_75 = arith.constant 1.000000e+00 : f32
    %142 = vector.broadcast %cst_75 : f32 to vector<8x16xf32>
    %143 = arith.cmpf oge, %141, %142 : vector<8x16xf32>
    %144 = arith.extui %143 : vector<8x16xi1> to vector<8x16xi32>
    %145 = arith.sitofp %144 : vector<8x16xi32> to vector<8x16xf32>
    %146 = arith.truncf %145 : vector<8x16xf32> to vector<8x16xbf16>
    %c4_76 = arith.constant 4 : index
    %c0_77 = arith.constant 0 : index
    %c0_78 = arith.constant 0 : index
    %147 = vector.load %arg4[%c4_76, %c0_77, %c0_78] : memref<8x8x16xbf16, #tpu.memory_space<vmem>>, vector<1x8x16xbf16>
    %148 = vector.shape_cast %147 : vector<1x8x16xbf16> to vector<8x16xbf16>
    %149 = vector.shape_cast %146 : vector<8x16xbf16> to vector<1x8x16xbf16>
    tpu.vector_store %arg4[%c4_76, %c0_77, %c0_78], %149 {strides = array<i32>} : memref<8x8x16xbf16, #tpu.memory_space<vmem>>, vector<1x8x16xbf16>,
    %cst_79 = arith.constant 0.000000e+00 : f32
    %150 = vector.broadcast %cst_79 : f32 to vector<8x16xf32>
    %151 = arith.select %143, %150, %141 : vector<8x16xi1>, vector<8x16xf32>
    %152 = vector.broadcast %15 : f32 to vector<8x16xf32>
    %153 = arith.mulf %33, %152 : vector<8x16xf32>
    %154 = vector.broadcast %16 : f32 to vector<8x16xf32>
    %155 = arith.mulf %34, %154 : vector<8x16xf32>
    %156 = arith.addf %153, %155 : vector<8x16xf32>
    %157 = vector.broadcast %17 : f32 to vector<8x16xf32>
    %158 = arith.mulf %35, %157 : vector<8x16xf32>
    %159 = arith.addf %156, %158 : vector<8x16xf32>
    %160 = vector.broadcast %29 : f32 to vector<8x16xf32>
    %161 = arith.addf %159, %160 : vector<8x16xf32>
    %cst_80 = arith.constant 5.000000e-01 : f32
    %162 = vector.broadcast %cst_80 : f32 to vector<8x16xf32>
    %163 = arith.mulf %151, %162 : vector<8x16xf32>
    %164 = arith.addf %163, %161 : vector<8x16xf32>
    %cst_81 = arith.constant 1.000000e+00 : f32
    %165 = vector.broadcast %cst_81 : f32 to vector<8x16xf32>
    %166 = arith.cmpf oge, %164, %165 : vector<8x16xf32>
    %167 = arith.extui %166 : vector<8x16xi1> to vector<8x16xi32>
    %168 = arith.sitofp %167 : vector<8x16xi32> to vector<8x16xf32>
    %169 = arith.truncf %168 : vector<8x16xf32> to vector<8x16xbf16>
    %c5_82 = arith.constant 5 : index
    %c0_83 = arith.constant 0 : index
    %c0_84 = arith.constant 0 : index
    %170 = vector.load %arg4[%c5_82, %c0_83, %c0_84] : memref<8x8x16xbf16, #tpu.memory_space<vmem>>, vector<1x8x16xbf16>
    %171 = vector.shape_cast %170 : vector<1x8x16xbf16> to vector<8x16xbf16>
    %172 = vector.shape_cast %169 : vector<8x16xbf16> to vector<1x8x16xbf16>
    tpu.vector_store %arg4[%c5_82, %c0_83, %c0_84], %172 {strides = array<i32>} : memref<8x8x16xbf16, #tpu.memory_space<vmem>>, vector<1x8x16xbf16>,
    %cst_85 = arith.constant 0.000000e+00 : f32
    %173 = vector.broadcast %cst_85 : f32 to vector<8x16xf32>
    %174 = arith.select %166, %173, %164 : vector<8x16xi1>, vector<8x16xf32>
    %175 = vector.broadcast %18 : f32 to vector<8x16xf32>
    %176 = arith.mulf %33, %175 : vector<8x16xf32>
    %177 = vector.broadcast %19 : f32 to vector<8x16xf32>
    %178 = arith.mulf %34, %177 : vector<8x16xf32>
    %179 = arith.addf %176, %178 : vector<8x16xf32>
    %180 = vector.broadcast %20 : f32 to vector<8x16xf32>
    %181 = arith.mulf %35, %180 : vector<8x16xf32>
    %182 = arith.addf %179, %181 : vector<8x16xf32>
    %183 = vector.broadcast %30 : f32 to vector<8x16xf32>
    %184 = arith.addf %182, %183 : vector<8x16xf32>
    %cst_86 = arith.constant 5.000000e-01 : f32
    %185 = vector.broadcast %cst_86 : f32 to vector<8x16xf32>
    %186 = arith.mulf %174, %185 : vector<8x16xf32>
    %187 = arith.addf %186, %184 : vector<8x16xf32>
    %cst_87 = arith.constant 1.000000e+00 : f32
    %188 = vector.broadcast %cst_87 : f32 to vector<8x16xf32>
    %189 = arith.cmpf oge, %187, %188 : vector<8x16xf32>
    %190 = arith.extui %189 : vector<8x16xi1> to vector<8x16xi32>
    %191 = arith.sitofp %190 : vector<8x16xi32> to vector<8x16xf32>
    %192 = arith.truncf %191 : vector<8x16xf32> to vector<8x16xbf16>
    %c6_88 = arith.constant 6 : index
    %c0_89 = arith.constant 0 : index
    %c0_90 = arith.constant 0 : index
    %193 = vector.load %arg4[%c6_88, %c0_89, %c0_90] : memref<8x8x16xbf16, #tpu.memory_space<vmem>>, vector<1x8x16xbf16>
    %194 = vector.shape_cast %193 : vector<1x8x16xbf16> to vector<8x16xbf16>
    %195 = vector.shape_cast %192 : vector<8x16xbf16> to vector<1x8x16xbf16>
    tpu.vector_store %arg4[%c6_88, %c0_89, %c0_90], %195 {strides = array<i32>} : memref<8x8x16xbf16, #tpu.memory_space<vmem>>, vector<1x8x16xbf16>,
    %cst_91 = arith.constant 0.000000e+00 : f32
    %196 = vector.broadcast %cst_91 : f32 to vector<8x16xf32>
    %197 = arith.select %189, %196, %187 : vector<8x16xi1>, vector<8x16xf32>
    %198 = vector.broadcast %21 : f32 to vector<8x16xf32>
    %199 = arith.mulf %33, %198 : vector<8x16xf32>
    %200 = vector.broadcast %22 : f32 to vector<8x16xf32>
    %201 = arith.mulf %34, %200 : vector<8x16xf32>
    %202 = arith.addf %199, %201 : vector<8x16xf32>
    %203 = vector.broadcast %23 : f32 to vector<8x16xf32>
    %204 = arith.mulf %35, %203 : vector<8x16xf32>
    %205 = arith.addf %202, %204 : vector<8x16xf32>
    %206 = vector.broadcast %31 : f32 to vector<8x16xf32>
    %207 = arith.addf %205, %206 : vector<8x16xf32>
    %cst_92 = arith.constant 5.000000e-01 : f32
    %208 = vector.broadcast %cst_92 : f32 to vector<8x16xf32>
    %209 = arith.mulf %197, %208 : vector<8x16xf32>
    %210 = arith.addf %209, %207 : vector<8x16xf32>
    %cst_93 = arith.constant 1.000000e+00 : f32
    %211 = vector.broadcast %cst_93 : f32 to vector<8x16xf32>
    %212 = arith.cmpf oge, %210, %211 : vector<8x16xf32>
    %213 = arith.extui %212 : vector<8x16xi1> to vector<8x16xi32>
    %214 = arith.sitofp %213 : vector<8x16xi32> to vector<8x16xf32>
    %215 = arith.truncf %214 : vector<8x16xf32> to vector<8x16xbf16>
    %c7_94 = arith.constant 7 : index
    %c0_95 = arith.constant 0 : index
    %c0_96 = arith.constant 0 : index
    %216 = vector.load %arg4[%c7_94, %c0_95, %c0_96] : memref<8x8x16xbf16, #tpu.memory_space<vmem>>, vector<1x8x16xbf16>
    %217 = vector.shape_cast %216 : vector<1x8x16xbf16> to vector<8x16xbf16>
    %218 = vector.shape_cast %215 : vector<8x16xbf16> to vector<1x8x16xbf16>
    tpu.vector_store %arg4[%c7_94, %c0_95, %c0_96], %218 {strides = array<i32>} : memref<8x8x16xbf16, #tpu.memory_space<vmem>>, vector<1x8x16xbf16>,
    return
  }
  func.func @transform_0(%arg0: i32) -> (i32, i32) {
    %c0_i32 = arith.constant 0 : i32
    %c0_i32_0 = arith.constant 0 : i32
    return %arg0, %c0_i32 : i32, i32
  }
  func.func @transform_1(%arg0: i32) -> (i32, i32) {
    %c0_i32 = arith.constant 0 : i32
    %c0_i32_0 = arith.constant 0 : i32
    %c0_i32_1 = arith.constant 0 : i32
    return %c0_i32, %c0_i32_0 : i32, i32
  }
  func.func @transform_2(%arg0: i32) -> i32 {
    %c0_i32 = arith.constant 0 : i32
    %c0_i32_0 = arith.constant 0 : i32
    return %c0_i32 : i32
  }
  func.func @transform_3(%arg0: i32) -> (i32, i32, i32) {
    %c0_i32 = arith.constant 0 : i32
    %c0_i32_0 = arith.constant 0 : i32
    %c0_i32_1 = arith.constant 0 : i32
    return %c0_i32, %arg0, %c0_i32_0 : i32, i32, i32
  }
}

</mosaic_0001>

<llo_original>
// kernel: tpu_custom_call.1
$region0: #{tpu_custom_call.1}
  #allocation0 [shape = 'u32[]', space=smem, size = 0x4, offset = 0x4, fixed_abs, tag = 'smem constant byte address 0x4 - core index']
  #allocation1 [shape = 'u32[72,128]{1,0:T(1,128)}', space=vmem, size = 0x9000, scoped, tag = 'internal scratch']
  %s0 = inlined_call_operand.vmem [shape: f32[8,18], index: 0, kind: input, shape index: {}]
  %s1 = inlined_call_operand.vmem [shape: f32[8,3], index: 1, kind: input, shape index: {}]
  %s2 = inlined_call_operand.vmem [shape: f32[8], index: 2, kind: input, shape index: {}]
  %s3 = inlined_call_operand.hbm [shape: bf16[8,8,16], index: 3, kind: output, shape index: {}]
  %s4 = sld [smem:[#allocation0]]
  $region30: #{tpu_custom_call.1} parent=0
    _
  %s6 = ssub.s32 1, %s4
  %s7 = scalar_select 0, %s6, %s4
  $region1: #{tpu_custom_call.1} parent=0
    #allocation2 [shape = 'u8[4096]{0}', space=smem, size = 0x1000, scoped, tag = 'input window, operand 1, single buffered']
    #allocation3 [shape = 's32[1]{0}', space=sflag, size = 0x4, scoped, tag = 'scoped memory for tpu_custom_call.1']
    #allocation4 [shape = 's32[1]{0}', space=sflag, size = 0x4, scoped, tag = 'scoped memory for tpu_custom_call.1']
    #allocation5 [shape = 'u8[512]{0}', space=smem, size = 0x200, scoped, tag = 'input window, operand 2, single buffered']
    #allocation6 [shape = 's32[1]{0}', space=sflag, size = 0x4, scoped, tag = 'scoped memory for tpu_custom_call.1']
    #allocation7 [shape = 'u8[16384]{0}', space=vmem, size = 0x4000, scoped, tag = 'output window, operand 0, single buffered']
    %8 = vsyncpa [#allocation4], 0
    %9 = vsyncpa [#allocation6], 0
    %10 = vsyncpa [#allocation3], 0
    // Predicated region
    $region2: #{tpu_custom_call.1} parent=1 // pred_check
      _
    $region3: #{tpu_custom_call.1} parent=1 // pred_check_branch
      %12 = sbr.rel (0) target = $region5
    $region4: #{tpu_custom_call.1} parent=1 // pred_region
      _
    $region5: #{tpu_custom_call.1} parent=1 // pred_fallthru
      _
    // Predicated region
    $region6: #{tpu_custom_call.1} parent=1 // pred_check
      _
    $region7: #{tpu_custom_call.1} parent=1 // pred_check_branch
      %14 = sbr.rel (0) target = $region9
    $region8: #{tpu_custom_call.1} parent=1 // pred_region
      %16 = vsyncadd [#allocation4], 0
      %s18 = sshll.u32 %s1, 4
      %s19 = int_to_ptr.vmem [resolvable:$true] %s18
      %21 = dma.vmem_to_smem %s19, 128, [#allocation2], [#allocation4]
    $region9: #{tpu_custom_call.1} parent=1 // pred_fallthru
      _
    // Predicated region
    $region10: #{tpu_custom_call.1} parent=1 // pred_check
      _
    $region11: #{tpu_custom_call.1} parent=1 // pred_check_branch
      %23 = sbr.rel (0) target = $region13
    $region12: #{tpu_custom_call.1} parent=1 // pred_region
      %25 = vsyncadd [#allocation6], 0
      %s27 = sshll.u32 %s2, 4
      %s28 = int_to_ptr.vmem [resolvable:$true] %s27
      %30 = dma.vmem_to_smem %s28, 16, [#allocation5], [#allocation6]
    $region13: #{tpu_custom_call.1} parent=1 // pred_fallthru
      _
    // Predicated region
    $region14: #{tpu_custom_call.1} parent=1 // pred_check
      _
    $region15: #{tpu_custom_call.1} parent=1 // pred_check_branch
      %32 = sbr.rel (0) target = $region17
    $region16: #{tpu_custom_call.1} parent=1 // pred_region
      %34 = dma.done [#allocation4], 128
    $region17: #{tpu_custom_call.1} parent=1 // pred_fallthru
      _
    // Predicated region
    $region18: #{tpu_custom_call.1} parent=1 // pred_check
      _
    $region19: #{tpu_custom_call.1} parent=1 // pred_check_branch
      %36 = sbr.rel (0) target = $region21
    $region20: #{tpu_custom_call.1} parent=1 // pred_region
      %38 = dma.done [#allocation6], 16
    $region21: #{tpu_custom_call.1} parent=1 // pred_fallthru
      _
    %39 = sfence
    %s40 = sld [smem:[#allocation2]]
    %s41 = sld [smem:[#allocation2 + $0x1]]
    %s42 = sld [smem:[#allocation2 + $0x2]]
    %s43 = sld [smem:[#allocation2 + $0x80]]
    %s44 = sld [smem:[#allocation2 + $0x81]]
    %s45 = sld [smem:[#allocation2 + $0x82]]
    %s46 = sld [smem:[#allocation2 + $0x100]]
    %s47 = sld [smem:[#allocation2 + $0x101]]
    %s48 = sld [smem:[#allocation2 + $0x102]]
    %s49 = sld [smem:[#allocation2 + $0x180]]
    %s50 = sld [smem:[#allocation2 + $0x181]]
    %s51 = sld [smem:[#allocation2 + $0x182]]
    %s52 = sld [smem:[#allocation2 + $0x200]]
    %s53 = sld [smem:[#allocation2 + $0x201]]
    %s54 = sld [smem:[#allocation2 + $0x202]]
    %s55 = sld [smem:[#allocation2 + $0x280]]
    %s56 = sld [smem:[#allocation2 + $0x281]]
    %s57 = sld [smem:[#allocation2 + $0x282]]
    %s58 = sld [smem:[#allocation2 + $0x300]]
    %s59 = sld [smem:[#allocation2 + $0x301]]
    %s60 = sld [smem:[#allocation2 + $0x302]]
    %s61 = sld [smem:[#allocation2 + $0x380]]
    %s62 = sld [smem:[#allocation2 + $0x381]]
    %s63 = sld [smem:[#allocation2 + $0x382]]
    %s64 = sld [smem:[#allocation5]]
    %s65 = sld [smem:[#allocation5 + $0x1]]
    %s66 = sld [smem:[#allocation5 + $0x2]]
    %s67 = sld [smem:[#allocation5 + $0x3]]
    %s68 = sld [smem:[#allocation5 + $0x4]]
    %s69 = sld [smem:[#allocation5 + $0x5]]
    %s70 = sld [smem:[#allocation5 + $0x6]]
    %s71 = sld [smem:[#allocation5 + $0x7]]
    %v72 = vld [vmem:[%s0] sm:$0xff]
    %v73 = vstv %s40
    %v74 = vmul.f32 %v72, %v73
    %v75 = vstv %s41
    %v76 = vmul.f32 %v72, %v75
    %78 = vrot.lane.b32.xlu0 %v76, 127
    %v79 = vpop.permute.xlu0 %78
    %v81 = vadd.f32 %v74, %v79
    %v82 = vstv %s42
    %v83 = vmul.f32 %v72, %v82
    %85 = vrot.lane.b32.xlu0 %v83, 126
    %v86 = vpop.permute.xlu0 %85
    %v88 = vadd.f32 %v81, %v86
    %v89 = vstv %s64
    %v90 = vadd.f32 %v88, %v89
    %v91 = vadd.f32 %v90, 0.0
    %vm92 = vcmp.ge.f32.partialorder %v91, 1.0
    %v93 = vsel %vm92, 1, 0
    %v94 = vcvt.s32.f32 %v93
    %v95 = vpack.c.bf16 %v94, %v94
    %vm96 = vcmask 125952
    %97 = vst.msk [vmem:[#allocation7] sm:$0xf] %vm96, %v95
    %v98 = vsel %vm92, 0.0, %v91
    %v99 = vstv %s43
    %v100 = vmul.f32 %v72, %v99
    %v101 = vstv %s44
    %v102 = vmul.f32 %v72, %v101
    %104 = vrot.lane.b32.xlu0 %v102, 127
    %v105 = vpop.permute.xlu0 %104
    %v107 = vadd.f32 %v100, %v105
    %v108 = vstv %s45
    %v109 = vmul.f32 %v72, %v108
    %111 = vrot.lane.b32.xlu0 %v109, 126
    %v112 = vpop.permute.xlu0 %111
    %v114 = vadd.f32 %v107, %v112
    %v115 = vstv %s65
    %v116 = vadd.f32 %v114, %v115
    %v117 = vmul.f32 %v98, 0.5
    %v118 = vadd.f32 %v117, %v116
    %vm119 = vcmp.ge.f32.partialorder %v118, 1.0
    %v120 = vsel %vm119, 1, 0
    %v121 = vcvt.s32.f32 %v120
    %v122 = vpack.c.bf16 %v121, %v121
    %s123 = scalar_lea.vmem [#allocation7], 4
    %124 = vst.msk [vmem:[%s123] sm:$0xf] %vm96, %v122
    %v125 = vsel %vm119, 0.0, %v118
    %v126 = vstv %s46
    %v127 = vmul.f32 %v72, %v126
    %v128 = vstv %s47
    %v129 = vmul.f32 %v72, %v128
    %131 = vrot.lane.b32.xlu0 %v129, 127
    %v132 = vpop.permute.xlu0 %131
    %v134 = vadd.f32 %v127, %v132
    %v135 = vstv %s48
    %v136 = vmul.f32 %v72, %v135
    %138 = vrot.lane.b32.xlu0 %v136, 126
    %v139 = vpop.permute.xlu0 %138
    %v141 = vadd.f32 %v134, %v139
    %v142 = vstv %s66
    %v143 = vadd.f32 %v141, %v142
    %v144 = vmul.f32 %v125, 0.5
    %v145 = vadd.f32 %v144, %v143
    %vm146 = vcmp.ge.f32.partialorder %v145, 1.0
    %v147 = vsel %vm146, 1, 0
    %v148 = vcvt.s32.f32 %v147
    %v149 = vpack.c.bf16 %v148, %v148
    %s150 = scalar_lea.vmem [#allocation7], 8
    %151 = vst.msk [vmem:[%s150] sm:$0xf] %vm96, %v149
    %v152 = vsel %vm146, 0.0, %v145
    %v153 = vstv %s49
    %v154 = vmul.f32 %v72, %v153
    %v155 = vstv %s50
    %v156 = vmul.f32 %v72, %v155
    %158 = vrot.lane.b32.xlu0 %v156, 127
    %v159 = vpop.permute.xlu0 %158
    %v161 = vadd.f32 %v154, %v159
    %v162 = vstv %s51
    %v163 = vmul.f32 %v72, %v162
    %165 = vrot.lane.b32.xlu0 %v163, 126
    %v166 = vpop.permute.xlu0 %165
    %v168 = vadd.f32 %v161, %v166
    %v169 = vstv %s67
    %v170 = vadd.f32 %v168, %v169
    %v171 = vmul.f32 %v152, 0.5
    %v172 = vadd.f32 %v171, %v170
    %vm173 = vcmp.ge.f32.partialorder %v172, 1.0
    %v174 = vsel %vm173, 1, 0
    %v175 = vcvt.s32.f32 %v174
    %v176 = vpack.c.bf16 %v175, %v175
    %s177 = scalar_lea.vmem [#allocation7], 12
    %178 = vst.msk [vmem:[%s177] sm:$0xf] %vm96, %v176
    %v179 = vsel %vm173, 0.0, %v172
    %v180 = vstv %s52
    %v181 = vmul.f32 %v72, %v180
    %v182 = vstv %s53
    %v183 = vmul.f32 %v72, %v182
    %185 = vrot.lane.b32.xlu0 %v183, 127
    %v186 = vpop.permute.xlu0 %185
    %v188 = vadd.f32 %v181, %v186
    %v189 = vstv %s54
    %v190 = vmul.f32 %v72, %v189
    %192 = vrot.lane.b32.xlu0 %v190, 126
    %v193 = vpop.permute.xlu0 %192
    %v195 = vadd.f32 %v188, %v193
    %v196 = vstv %s68
    %v197 = vadd.f32 %v195, %v196
    %v198 = vmul.f32 %v179, 0.5
    %v199 = vadd.f32 %v198, %v197
    %vm200 = vcmp.ge.f32.partialorder %v199, 1.0
    %v201 = vsel %vm200, 1, 0
    %v202 = vcvt.s32.f32 %v201
    %v203 = vpack.c.bf16 %v202, %v202
    %s204 = scalar_lea.vmem [#allocation7], 16
    %205 = vst.msk [vmem:[%s204] sm:$0xf] %vm96, %v203
    %v206 = vsel %vm200, 0.0, %v199
    %v207 = vstv %s55
    %v208 = vmul.f32 %v72, %v207
    %v209 = vstv %s56
    %v210 = vmul.f32 %v72, %v209
    %212 = vrot.lane.b32.xlu0 %v210, 127
    %v213 = vpop.permute.xlu0 %212
    %v215 = vadd.f32 %v208, %v213
    %v216 = vstv %s57
    %v217 = vmul.f32 %v72, %v216
    %219 = vrot.lane.b32.xlu0 %v217, 126
    %v220 = vpop.permute.xlu0 %219
    %v222 = vadd.f32 %v215, %v220
    %v223 = vstv %s69
    %v224 = vadd.f32 %v222, %v223
    %v225 = vmul.f32 %v206, 0.5
    %v226 = vadd.f32 %v225, %v224
    %vm227 = vcmp.ge.f32.partialorder %v226, 1.0
    %v228 = vsel %vm227, 1, 0
    %v229 = vcvt.s32.f32 %v228
    %v230 = vpack.c.bf16 %v229, %v229
    %s231 = scalar_lea.vmem [#allocation7], 20
    %232 = vst.msk [vmem:[%s231] sm:$0xf] %vm96, %v230
    %v233 = vsel %vm227, 0.0, %v226
    %v234 = vstv %s58
    %v235 = vmul.f32 %v72, %v234
    %v236 = vstv %s59
    %v237 = vmul.f32 %v72, %v236
    %239 = vrot.lane.b32.xlu0 %v237, 127
    %v240 = vpop.permute.xlu0 %239
    %v242 = vadd.f32 %v235, %v240
    %v243 = vstv %s60
    %v244 = vmul.f32 %v72, %v243
    %246 = vrot.lane.b32.xlu0 %v244, 126
    %v247 = vpop.permute.xlu0 %246
    %v249 = vadd.f32 %v242, %v247
    %v250 = vstv %s70
    %v251 = vadd.f32 %v249, %v250
    %v252 = vmul.f32 %v233, 0.5
    %v253 = vadd.f32 %v252, %v251
    %vm254 = vcmp.ge.f32.partialorder %v253, 1.0
    %v255 = vsel %vm254, 1, 0
    %v256 = vcvt.s32.f32 %v255
    %v257 = vpack.c.bf16 %v256, %v256
    %s258 = scalar_lea.vmem [#allocation7], 24
    %259 = vst.msk [vmem:[%s258] sm:$0xf] %vm96, %v257
    %v260 = vsel %vm254, 0.0, %v253
    %v261 = vstv %s61
    %v262 = vmul.f32 %v72, %v261
    %v263 = vstv %s62
    %v264 = vmul.f32 %v72, %v263
    %266 = vrot.lane.b32.xlu0 %v264, 127
    %v267 = vpop.permute.xlu0 %266
    %v269 = vadd.f32 %v262, %v267
    %v270 = vstv %s63
    %v271 = vmul.f32 %v72, %v270
    %273 = vrot.lane.b32.xlu0 %v271, 126
    %v274 = vpop.permute.xlu0 %273
    %v276 = vadd.f32 %v269, %v274
    %v277 = vstv %s71
    %v278 = vadd.f32 %v276, %v277
    %v279 = vmul.f32 %v260, 0.5
    %v280 = vadd.f32 %v279, %v278
    %vm281 = vcmp.ge.f32.partialorder %v280, 1.0
    %v282 = vsel %vm281, 1, 0
    %v283 = vcvt.s32.f32 %v282
    %v284 = vpack.c.bf16 %v283, %v283
    %s285 = scalar_lea.vmem [#allocation7], 28
    %286 = vst.msk [vmem:[%s285] sm:$0xf] %vm96, %v284
    // Predicated region
    $region22: #{tpu_custom_call.1} parent=1 // pred_check
      _
    $region23: #{tpu_custom_call.1} parent=1 // pred_check_branch
      %288 = sbr.rel (0) target = $region25
    $region24: #{tpu_custom_call.1} parent=1 // pred_region
      %290 = vsyncadd [#allocation3], 0
      %s291 = sshll.u32 [#allocation7], 4
      %s292 = int_to_ptr.vmem [resolvable:$true] %s291
      %s293 = sshll.u32 %s3, 4
      %s294 = int_to_ptr.hbm [resolvable:$true] %s293
      %299 = dma.vmem_to_hbm [thread:$0]  %s292, 512, %s294, [#allocation3], 64, 64, 4
    $region25: #{tpu_custom_call.1} parent=1 // pred_fallthru
      _
    // Predicated region
    $region26: #{tpu_custom_call.1} parent=1 // pred_check
      _
    $region27: #{tpu_custom_call.1} parent=1 // pred_check_branch
      %301 = sbr.rel (0) target = $region29
    $region28: #{tpu_custom_call.1} parent=1 // pred_region
      %303 = dma.done [#allocation3], 512
    $region29: #{tpu_custom_call.1} parent=1 // pred_fallthru
      _
    %304 = vsyncpa [#allocation3], 1
    %305 = vsyncpa [#allocation4], 1
    %306 = vsyncpa [#allocation6], 1

</llo_original>
